<compile_context>
chip_gen: v6e
topology: v6e:2x2x1
jax: 0.10.0
libtpu: 0.0.40
codegen_flags: <defaults>
</compile_context>

<pallas_src>
import jax
import jax.numpy as jnp
from jax.experimental import pallas as pl
from jax.experimental.pallas import tpu as pltpu


def _normalize_kernel(x_ref, scale_ref, bias_ref, o_ref):
    # Single broadcast FMA per vreg. scale/bias are either a (block_r, 1)
    # column or a (1, block_c) row; both broadcast against (block_r, block_c).
    # Math promotes to f32 (scale/bias are f32); cast back for bf16 inputs.
    o_ref[...] = (x_ref[...] * scale_ref[...] + bias_ref[...]).astype(o_ref.dtype)


def _cdiv(a, b):
    return -(-a // b)


def _vmem_capacity_bytes():
    try:
        cap = getattr(pltpu.get_tpu_info(), "vmem_capacity_bytes", None)
        if cap:
            return int(cap)
    except Exception:
        pass
    return 64 * 1024 * 1024  # conservative fallback (v7x per-TC VMEM)


def _largest_aligned_divisor(length, cap):
    """Largest c with c % 128 == 0, length % c == 0, c <= cap (0 if none)."""
    if length % 128 != 0 or cap < 128:
        return 0
    base = length // 128
    best = 0
    i = 1
    while i * i <= base:
        if base % i == 0:
            for d in (i, base // i):
                c = d * 128
                if best < c <= cap:
                    best = c
        i += 1
    return best


def _choose_block_c(length, itemsize, budget, sublane):
    """Lane-dim block: full extent if it fits; else the largest 128-multiple
    divisor (unmasked full-width stores); else a 128-multiple cap (masked tail)."""
    if length * itemsize <= budget:
        return length  # equals full array dim -> always legal
    cap = max(128, (budget // (sublane * itemsize)) // 128 * 128)
    c = _largest_aligned_divisor(length, cap)
    return c if c else cap


def normalize(x, mean, std, *, target_block_bytes=None, vmem_limit_bytes=None):
    """Pallas equivalent of Normalize.forward for NCHW input x."""
    N, C, H, W = x.shape
    assert mean.shape == (C,) and std.shape == (C,)
    HW = H * W
    itemsize = jnp.dtype(x.dtype).itemsize
    sublane = {4: 8, 2: 16, 1: 32}.get(itemsize, 8)

    # ---- generation-aware tile / VMEM budget ----
    vmem_cap = _vmem_capacity_bytes()
    if target_block_bytes is None:
        # 1/8 of this core's VMEM: 16 MiB on v5e/v6e, 8 MiB on v7x.
        target_block_bytes = min(16 * 1024 * 1024, vmem_cap // 8)
    if vmem_limit_bytes is None:
        # ~2x(in+out) double-buffered tiles + headroom; 48 MiB on v7x, 96 MiB v5e/v6e.
        vmem_limit_bytes = max(32 * 1024 * 1024,
                               min(6 * target_block_bytes, vmem_cap - vmem_cap // 4))

    # Fold the divide into a per-channel FMA (constant-folds under jit when
    # mean/std are static buffers).
    inv_std = 1.0 / std.astype(jnp.float32)
    neg_mean_over_std = -mean.astype(jnp.float32) * inv_std

    if HW >= 128 and HW % 128 == 0:
        # Lane-dense path: (N*C, H*W), per-row (R, 1) scale/bias columns.
        rows, cols = N * C, HW
        x2 = x.reshape(rows, cols)
        scale = jnp.tile(inv_std, N).reshape(rows, 1)
        bias = jnp.tile(neg_mean_over_std, N).reshape(rows, 1)
        sb_block = lambda br, bc: (br, 1)
        sb_index = lambda i, j: (i, 0)
    else:
        # Small / ragged H*W: (N, C*H*W) keeps stores wide; scale/bias become a
        # (1, C*HW) lane row (per-channel value repeated H*W times) broadcast
        # over sublanes.
        rows, cols = N, C * HW
        x2 = x.reshape(rows, cols)
        scale = jnp.repeat(inv_std, HW).reshape(1, cols)
        bias = jnp.repeat(neg_mean_over_std, HW).reshape(1, cols)
        sb_block = lambda br, bc: (1, bc)
        sb_index = lambda i, j: (0, j)

    # ---- tile sizing (pure HBM streaming; big lane-dense tiles) ----
    block_c = _choose_block_c(cols, itemsize, target_block_bytes, sublane)
    rows_budget = max(1, target_block_bytes // (block_c * itemsize))
    if rows <= rows_budget:
        block_r = rows  # equals full array dim -> always legal
    else:
        block_r = max(sublane, (rows_budget // sublane) * sublane)

    grid = (_cdiv(rows, block_r), _cdiv(cols, block_c))

    # v7x has 2 TensorCores: a large array must yield >= 2 "parallel" blocks.
    if grid == (1, 1) and rows * cols * itemsize >= (2 << 20):
        if block_c % 256 == 0:
            block_c //= 2                      # even, 128-aligned column halves
        elif rows >= 2 * sublane:
            block_r = _cdiv(_cdiv(rows, 2), sublane) * sublane
        grid = (_cdiv(rows, block_r), _cdiv(cols, block_c))

    out2 = pl.pallas_call(
        _normalize_kernel,
        out_shape=jax.ShapeDtypeStruct((rows, cols), x.dtype),
        grid=grid,
        in_specs=[
            pl.BlockSpec((block_r, block_c), lambda i, j: (i, j)),
            pl.BlockSpec(sb_block(block_r, block_c), sb_index),
            pl.BlockSpec(sb_block(block_r, block_c), sb_index),
        ],
        out_specs=pl.BlockSpec((block_r, block_c), lambda i, j: (i, j)),
        compiler_params=pltpu.CompilerParams(
            dimension_semantics=("parallel", "parallel"),
            vmem_limit_bytes=int(vmem_limit_bytes),
        ),
    )(x2, scale, bias)

    return out2.reshape(N, C, H, W)


if __name__ == "__main__":
    # Deterministic "buffers" (the module reshapes them to (1, 3, 1, 1))
    mean = jnp.array([0.485, 0.456, 0.406], dtype=jnp.float32)
    std = jnp.array([0.229, 0.224, 0.225], dtype=jnp.float32)

    # Small NCHW input: batch=2, channels=3 (module is hard-wired to 3), spatial=16
    key = jax.random.PRNGKey(0)
    x = jax.random.normal(key, (2, 3, 16, 16), dtype=jnp.float32)

    out = jax.block_until_ready(normalize(x, mean, std))

    # Correctness check against a plain-JAX reference of the PyTorch forward
    ref = (x - mean.reshape(1, 3, 1, 1)) / std.reshape(1, 3, 1, 1)
    assert out.shape == x.shape and out.dtype == x.dtype
    assert jnp.allclose(out, ref, atol=1e-5, rtol=1e-5)

    # Exercise the small/ragged-HW path too (HW = 7*9 = 63, not 128-aligned)
    x_ragged = jax.random.normal(jax.random.PRNGKey(0), (2, 3, 7, 9), jnp.float32)
    out_r = jax.block_until_ready(normalize(x_ragged, mean, std))
    ref_r = (x_ragged - mean.reshape(1, 3, 1, 1)) / std.reshape(1, 3, 1, 1)
    assert jnp.allclose(out_r, ref_r, atol=1e-5, rtol=1e-5)

    print("KERNEL_OK")
</pallas_src>

<mosaic_0001>
module attributes {stable_mosaic.version = 11 : i64} {
  func.func @_normalize_kernel(%arg0: i32, %arg1: i32, %arg2: memref<6x256xf32, #tpu.memory_space<vmem>>, %arg3: memref<6x1xf32, #tpu.memory_space<vmem>>, %arg4: memref<6x1xf32, #tpu.memory_space<vmem>>, %arg5: memref<6x256xf32, #tpu.memory_space<vmem>>) attributes {dimension_semantics = [#tpu.dimension_semantics<parallel>, #tpu.dimension_semantics<parallel>], iteration_bounds = array<i64: 1, 1>, scalar_prefetch = 0 : i64, scratch_operands = 0 : i64, tpu.core_type = #tpu.core_type<tc>, window_params = [{transform_indices = @transform_0, window_bounds = array<i64: 6, 256>}, {transform_indices = @transform_1, window_bounds = array<i64: 6, 1>}, {transform_indices = @transform_2, window_bounds = array<i64: 6, 1>}, {transform_indices = @transform_3, window_bounds = array<i64: 6, 256>}]} {
    %c0 = arith.constant 0 : index
    %c0_0 = arith.constant 0 : index
    %0 = vector.load %arg2[%c0, %c0_0] : memref<6x256xf32, #tpu.memory_space<vmem>>, vector<6x256xf32>
    %c0_1 = arith.constant 0 : index
    %c0_2 = arith.constant 0 : index
    %1 = vector.load %arg3[%c0_1, %c0_2] : memref<6x1xf32, #tpu.memory_space<vmem>>, vector<6x1xf32>
    %2 = vector.broadcast %1 : vector<6x1xf32> to vector<6x256xf32>
    %3 = arith.mulf %0, %2 : vector<6x256xf32>
    %c0_3 = arith.constant 0 : index
    %c0_4 = arith.constant 0 : index
    %4 = vector.load %arg4[%c0_3, %c0_4] : memref<6x1xf32, #tpu.memory_space<vmem>>, vector<6x1xf32>
    %5 = vector.broadcast %4 : vector<6x1xf32> to vector<6x256xf32>
    %6 = arith.addf %3, %5 : vector<6x256xf32>
    %c0_5 = arith.constant 0 : index
    %c0_6 = arith.constant 0 : index
    %7 = vector.load %arg5[%c0_5, %c0_6] : memref<6x256xf32, #tpu.memory_space<vmem>>, vector<6x256xf32>
    tpu.vector_store %arg5[%c0_5, %c0_6], %6 {strides = array<i32>} : memref<6x256xf32, #tpu.memory_space<vmem>>, vector<6x256xf32>,
    return
  }
  func.func @transform_0(%arg0: i32, %arg1: i32) -> (i32, i32) {
    %c0_i32 = arith.constant 0 : i32
    return %arg0, %arg1 : i32, i32
  }
  func.func @transform_1(%arg0: i32, %arg1: i32) -> (i32, i32) {
    %c0_i32 = arith.constant 0 : i32
    %c0_i32_0 = arith.constant 0 : i32
    return %arg0, %c0_i32 : i32, i32
  }
  func.func @transform_2(%arg0: i32, %arg1: i32) -> (i32, i32) {
    %c0_i32 = arith.constant 0 : i32
    %c0_i32_0 = arith.constant 0 : i32
    return %arg0, %c0_i32 : i32, i32
  }
  func.func @transform_3(%arg0: i32, %arg1: i32) -> (i32, i32) {
    %c0_i32 = arith.constant 0 : i32
    return %arg0, %arg1 : i32, i32
  }
}

</mosaic_0001>

<llo_original>
// kernel: tpu_custom_call.1
$region0: #{tpu_custom_call.1}
  #allocation0 [shape = 'u32[]', space=smem, size = 0x4, offset = 0x4, fixed_abs, tag = 'smem constant byte address 0x4 - core index']
  #allocation1 [shape = 'u32[144,128]{1,0:T(1,128)}', space=vmem, size = 0x12000, scoped, tag = 'internal scratch']
  %s0 = inlined_call_operand.vmem [shape: f32[6,256], index: 0, kind: input, shape index: {}]
  %s1 = inlined_call_operand.vmem [shape: f32[6,1], index: 1, kind: input, shape index: {}]
  %s2 = inlined_call_operand.vmem [shape: f32[6,1], index: 2, kind: input, shape index: {}]
  %s3 = inlined_call_operand.hbm [shape: f32[6,256], index: 3, kind: output, shape index: {}]
  %s4 = sld [smem:[#allocation0]]
  $region22: #{tpu_custom_call.1} parent=0
    _
  %s6 = ssub.s32 1, %s4
  %s7 = scalar_select 0, %s6, %s4
  $region1: #{tpu_custom_call.1} parent=0
    #allocation2 [shape = 'u8[8192]{0}', space=vmem, size = 0x2000, scoped, tag = 'output window, operand 0, single buffered']
    #allocation3 [shape = 's32[1]{0}', space=sflag, size = 0x4, scoped, tag = 'scoped memory for tpu_custom_call.1']
    %8 = vsyncpa [#allocation3], 0
    // Predicated region
    $region2: #{tpu_custom_call.1} parent=1 // pred_check
      _
    $region3: #{tpu_custom_call.1} parent=1 // pred_check_branch
      %10 = sbr.rel (0) target = $region5
    $region4: #{tpu_custom_call.1} parent=1 // pred_region
      _
    $region5: #{tpu_custom_call.1} parent=1 // pred_fallthru
      _
    // Predicated region
    $region6: #{tpu_custom_call.1} parent=1 // pred_check
      _
    $region7: #{tpu_custom_call.1} parent=1 // pred_check_branch
      %12 = sbr.rel (0) target = $region9
    $region8: #{tpu_custom_call.1} parent=1 // pred_region
      _
    $region9: #{tpu_custom_call.1} parent=1 // pred_fallthru
      _
    // Predicated region
    $region10: #{tpu_custom_call.1} parent=1 // pred_check
      _
    $region11: #{tpu_custom_call.1} parent=1 // pred_check_branch
      %14 = sbr.rel (0) target = $region13
    $region12: #{tpu_custom_call.1} parent=1 // pred_region
      _
    $region13: #{tpu_custom_call.1} parent=1 // pred_fallthru
      _
    %v15 = vld [vmem:[%s0] sm:$0x3f]
    %v16 = vld [vmem:[%s0 + $0x8] sm:$0x3f]
    %v17 = vld [vmem:[%s1] sm:$0x3f]
    %19 = vset.pattern.permute.xlu0 0
    %20 = vperm.xlu0 %19, %v17
    %v21 = vpop.permute.xlu0 %20
    %v23 = vmul.f32 %v15, %v21
    %v24 = vmul.f32 %v16, %v21
    %v25 = vld [vmem:[%s2] sm:$0x3f]
    %27 = vset.pattern.permute.xlu0 0
    %28 = vperm.xlu0 %27, %v25
    %v29 = vpop.permute.xlu0 %28
    %v31 = vadd.f32 %v23, %v29
    %v32 = vadd.f32 %v24, %v29
    %33 = vst [vmem:[#allocation2] sm:$0x3f] %v31
    %34 = vst [vmem:[#allocation2 + $0x8] sm:$0x3f] %v32
    // Predicated region
    $region14: #{tpu_custom_call.1} parent=1 // pred_check
      _
    $region15: #{tpu_custom_call.1} parent=1 // pred_check_branch
      %36 = sbr.rel (0) target = $region17
    $region16: #{tpu_custom_call.1} parent=1 // pred_region
      %s38 = ssub.s32 256, 256
      %39 = vsyncadd [#allocation3], %s38
      %s41 = sshll.u32 [#allocation2], 4
      %s42 = int_to_ptr.vmem [resolvable:$true] %s41
      %44 = dma.vmem_to_hbm [thread:$0]  %s42, 256, %s3, [#allocation3]
    $region17: #{tpu_custom_call.1} parent=1 // pred_fallthru
      _
    // Predicated region
    $region18: #{tpu_custom_call.1} parent=1 // pred_check
      _
    $region19: #{tpu_custom_call.1} parent=1 // pred_check_branch
      %46 = sbr.rel (0) target = $region21
    $region20: #{tpu_custom_call.1} parent=1 // pred_region
      %47 = dma.done [#allocation3], 256
    $region21: #{tpu_custom_call.1} parent=1 // pred_fallthru
      _
    %48 = vsyncpa [#allocation3], 1

</llo_original>
